<compile_context>
chip_gen: v6e
topology: v6e:2x2x1
jax: 0.10.0
libtpu: 0.0.40
codegen_flags: <defaults>
</compile_context>

<pallas_src>
import jax
import jax.numpy as jnp
from jax.experimental import pallas as pl
from jax.experimental.pallas import tpu as pltpu


def critic_kernel(x_ref, w1_ref, b1_ref, w2_ref, b2_ref, w3t_ref, b3_ref, o_ref):
    # x: (state_dim, TB) feature-major, batch on lanes.
    x = x_ref[...]
    w1 = w1_ref[...]                                    # (32, state_dim)
    state_dim = x.shape[0]

    # fc1 on the VPU: K=state_dim broadcast FMAs (outer-product style) --
    # avoids an MXU push/pop round trip at <1% MXU utilization.
    acc = w1[:, 0:1] * x[0:1, :]                        # (32, TB)
    for d in range(1, state_dim):
        acc = acc + w1[:, d:d + 1] * x[d:d + 1, :]
    h1 = jnp.maximum(acc + b1_ref[...], 0.0)            # (32, TB)

    # fc2 on the MXU (only layer with enough K/M to be worth it), full f32.
    h2 = jnp.dot(w2_ref[...], h1,
                 preferred_element_type=jnp.float32,
                 precision=jax.lax.Precision.HIGHEST) + b2_ref[...]
    h2 = jnp.maximum(h2, 0.0)                           # (16, TB)

    # fc3 (M=1) off the MXU: broadcast multiply + sublane reduce (VPU/XLU).
    v = jnp.sum(w3t_ref[...] * h2, axis=0, keepdims=True) + b3_ref[...]
    o_ref[...] = v.astype(o_ref.dtype)                  # (1, TB) lane-dense


def critic_forward(state, params, *, tile_b=16384, feature_major=False):
    """Critic forward pass.

    state: (B, state_dim) f32 (PyTorch layout), or (state_dim, B) when
           feature_major=True (preferred: skips the relayout transpose).
    params: PyTorch-style (out, in) weights and (out, 1) biases.
    Returns (B, 1) f32.
    """
    w1, b1, w2, b2, w3, b3 = params
    state_dim = w1.shape[1]

    x = state if feature_major else state.T             # (state_dim, B)
    assert x.shape[0] == state_dim
    B = x.shape[1]

    # Batch tiling: lane-aligned tiles; >= 2 (even) grid steps when B > 128 so
    # both v7x TensorCores get work; tile_b caps per-step VMEM.
    LANE = 128
    lanes = pl.cdiv(B, LANE)                            # 128-lane groups needed
    n_tiles = pl.cdiv(lanes, max(1, tile_b // LANE))
    if n_tiles == 1 and lanes >= 2:
        n_tiles = 2                                     # let the 2nd TC work
    if n_tiles > 1 and n_tiles % 2:
        n_tiles += 1                                    # even split across TCs
    tb = pl.cdiv(lanes, n_tiles) * LANE
    b_pad = n_tiles * tb

    if b_pad != B:
        # Fuses with the transpose under jit (single relayout copy). Padded
        # columns produce garbage values that are sliced off below.
        x = jnp.pad(x, ((0, 0), (0, b_pad - B)))

    w3t = w3.T                                          # (16, 1) for VPU fc3

    # Weights/biases: whole-array blocks, constant index maps (VMEM-resident,
    # never refetched across grid steps).
    const = lambda a: pl.BlockSpec(a.shape, lambda i: (0, 0))

    flops = 2 * B * (state_dim * 32 + 32 * 16 + 16 * 1)
    param_elems = w1.size + b1.size + w2.size + b2.size + w3.size + b3.size
    bytes_accessed = 4 * (B * state_dim + B + param_elems)

    out = pl.pallas_call(
        critic_kernel,
        out_shape=jax.ShapeDtypeStruct((1, b_pad), jnp.float32),
        grid=(n_tiles,),
        in_specs=[pl.BlockSpec((state_dim, tb), lambda i: (0, i)),
                  const(w1), const(b1), const(w2), const(b2),
                  const(w3t), const(b3)],
        out_specs=pl.BlockSpec((1, tb), lambda i: (0, i)),
        compiler_params=pltpu.CompilerParams(
            dimension_semantics=("parallel",),
            vmem_limit_bytes=32 * 1024 * 1024),
        cost_estimate=pl.CostEstimate(
            flops=flops, transcendentals=0, bytes_accessed=bytes_accessed),
    )(x, w1, b1, w2, b2, w3t, b3)

    return out[:, :B].T                                 # (B, 1)


def init_params(state_dim, key):
    """Deterministic init matching nn.Linear (PyTorch (out, in) storage)."""
    ks = jax.random.split(key, 6)

    def linear(kw, kb, fan_in, fan_out):
        bound = 1.0 / jnp.sqrt(fan_in)
        w = jax.random.uniform(kw, (fan_out, fan_in), jnp.float32, -bound, bound)
        b = jax.random.uniform(kb, (fan_out, 1), jnp.float32, -bound, bound)
        return w, b

    w1, b1 = linear(ks[0], ks[1], state_dim, 32)
    w2, b2 = linear(ks[2], ks[3], 32, 16)
    w3, b3 = linear(ks[4], ks[5], 16, 1)
    return (w1, b1, w2, b2, w3, b3)


def reference(s, p):
    """Pure-JAX reference of the PyTorch forward (full f32 matmul precision)."""
    w1, b1, w2, b2, w3, b3 = p
    with jax.default_matmul_precision("highest"):
        h = jnp.maximum(s @ w1.T + b1.T, 0.0)
        h = jnp.maximum(h @ w2.T + b2.T, 0.0)
        return h @ w3.T + b3.T


if __name__ == "__main__":
    key = jax.random.PRNGKey(0)
    k_param, k_state = jax.random.split(key)

    state_dim = 3   # Pendulum-v1 observation dim
    batch = 8

    params = init_params(state_dim, k_param)
    state = jax.random.normal(k_state, (batch, state_dim), jnp.float32)

    critic = jax.jit(critic_forward, static_argnames=("tile_b", "feature_major"))

    # PyTorch-layout (B, state_dim) path.
    out = jax.block_until_ready(critic(state, params))
    ref = reference(state, params)
    assert out.shape == (batch, 1)
    assert jnp.allclose(out, ref, atol=1e-5, rtol=1e-5)

    # Feature-major fast path (no wrapper transpose) + multi-tile grid + pad.
    big_batch = 1000
    state_fm = jax.random.normal(jax.random.PRNGKey(1), (state_dim, big_batch),
                                 jnp.float32)
    out2 = jax.block_until_ready(critic(state_fm, params, feature_major=True))
    ref2 = reference(state_fm.T, params)
    assert out2.shape == (big_batch, 1)
    assert jnp.allclose(out2, ref2, atol=1e-5, rtol=1e-5)

    print("KERNEL_OK")
</pallas_src>

<mosaic_0001>
module attributes {stable_mosaic.version = 11 : i64} {
  func.func @critic_kernel(%arg0: i32, %arg1: memref<3x128xf32, #tpu.memory_space<vmem>>, %arg2: memref<32x3xf32, #tpu.memory_space<vmem>>, %arg3: memref<32x1xf32, #tpu.memory_space<vmem>>, %arg4: memref<16x32xf32, #tpu.memory_space<vmem>>, %arg5: memref<16x1xf32, #tpu.memory_space<vmem>>, %arg6: memref<16x1xf32, #tpu.memory_space<vmem>>, %arg7: memref<1x1xf32, #tpu.memory_space<vmem>>, %arg8: memref<1x128xf32, #tpu.memory_space<vmem>>) attributes {dimension_semantics = [#tpu.dimension_semantics<parallel>], iteration_bounds = array<i64: 1>, scalar_prefetch = 0 : i64, scratch_operands = 0 : i64, tpu.core_type = #tpu.core_type<tc>, window_params = [{transform_indices = @transform_0, window_bounds = array<i64: 3, 128>}, {pipeline_mode = #tpu.pipeline_mode<synchronous>, transform_indices = @transform_1, window_bounds = array<i64: 32, 3>}, {pipeline_mode = #tpu.pipeline_mode<synchronous>, transform_indices = @transform_2, window_bounds = array<i64: 32, 1>}, {pipeline_mode = #tpu.pipeline_mode<synchronous>, transform_indices = @transform_3, window_bounds = array<i64: 16, 32>}, {pipeline_mode = #tpu.pipeline_mode<synchronous>, transform_indices = @transform_4, window_bounds = array<i64: 16, 1>}, {pipeline_mode = #tpu.pipeline_mode<synchronous>, transform_indices = @transform_5, window_bounds = array<i64: 16, 1>}, {pipeline_mode = #tpu.pipeline_mode<synchronous>, transform_indices = @transform_6, window_bounds = array<i64: 1, 1>}, {transform_indices = @transform_7, window_bounds = array<i64: 1, 128>}]} {
    %c0 = arith.constant 0 : index
    %c0_0 = arith.constant 0 : index
    %0 = vector.load %arg1[%c0, %c0_0] : memref<3x128xf32, #tpu.memory_space<vmem>>, vector<3x128xf32>
    %c0_1 = arith.constant 0 : index
    %c0_2 = arith.constant 0 : index
    %1 = vector.load %arg2[%c0_1, %c0_2] : memref<32x3xf32, #tpu.memory_space<vmem>>, vector<32x3xf32>
    %2 = vector.extract_strided_slice %1 {offsets = [0, 0], sizes = [32, 1], strides = [1, 1]} : vector<32x3xf32> to vector<32x1xf32>
    %3 = vector.extract_strided_slice %0 {offsets = [0, 0], sizes = [1, 128], strides = [1, 1]} : vector<3x128xf32> to vector<1x128xf32>
    %4 = vector.broadcast %2 : vector<32x1xf32> to vector<32x128xf32>
    %5 = vector.broadcast %3 : vector<1x128xf32> to vector<32x128xf32>
    %6 = arith.mulf %4, %5 : vector<32x128xf32>
    %7 = vector.extract_strided_slice %1 {offsets = [0, 1], sizes = [32, 1], strides = [1, 1]} : vector<32x3xf32> to vector<32x1xf32>
    %8 = vector.extract_strided_slice %0 {offsets = [1, 0], sizes = [1, 128], strides = [1, 1]} : vector<3x128xf32> to vector<1x128xf32>
    %9 = vector.broadcast %7 : vector<32x1xf32> to vector<32x128xf32>
    %10 = vector.broadcast %8 : vector<1x128xf32> to vector<32x128xf32>
    %11 = arith.mulf %9, %10 : vector<32x128xf32>
    %12 = arith.addf %6, %11 : vector<32x128xf32>
    %13 = vector.extract_strided_slice %1 {offsets = [0, 2], sizes = [32, 1], strides = [1, 1]} : vector<32x3xf32> to vector<32x1xf32>
    %14 = vector.extract_strided_slice %0 {offsets = [2, 0], sizes = [1, 128], strides = [1, 1]} : vector<3x128xf32> to vector<1x128xf32>
    %15 = vector.broadcast %13 : vector<32x1xf32> to vector<32x128xf32>
    %16 = vector.broadcast %14 : vector<1x128xf32> to vector<32x128xf32>
    %17 = arith.mulf %15, %16 : vector<32x128xf32>
    %18 = arith.addf %12, %17 : vector<32x128xf32>
    %c0_3 = arith.constant 0 : index
    %c0_4 = arith.constant 0 : index
    %19 = vector.load %arg3[%c0_3, %c0_4] : memref<32x1xf32, #tpu.memory_space<vmem>>, vector<32x1xf32>
    %20 = vector.broadcast %19 : vector<32x1xf32> to vector<32x128xf32>
    %21 = arith.addf %18, %20 : vector<32x128xf32>
    %cst = arith.constant 0.000000e+00 : f32
    %22 = vector.broadcast %cst : f32 to vector<32x128xf32>
    %23 = arith.maximumf %21, %22 : vector<32x128xf32>
    %c0_5 = arith.constant 0 : index
    %c0_6 = arith.constant 0 : index
    %24 = vector.load %arg4[%c0_5, %c0_6] : memref<16x32xf32, #tpu.memory_space<vmem>>, vector<16x32xf32>
    %cst_7 = arith.constant dense<0.000000e+00> : vector<16x128xf32>
    %25 = tpu.matmul %24, %23, %cst_7 {dimension_numbers = #tpu.dot_dimension_numbers<[1], [0], [0], [1], [0, 0, 1, 1], [], []>, precision = #tpu.contract_precision<fp32>} : vector<16x32xf32>, vector<32x128xf32>, vector<16x128xf32> -> vector<16x128xf32>
    %c0_8 = arith.constant 0 : index
    %c0_9 = arith.constant 0 : index
    %26 = vector.load %arg5[%c0_8, %c0_9] : memref<16x1xf32, #tpu.memory_space<vmem>>, vector<16x1xf32>
    %27 = vector.broadcast %26 : vector<16x1xf32> to vector<16x128xf32>
    %28 = arith.addf %25, %27 : vector<16x128xf32>
    %cst_10 = arith.constant 0.000000e+00 : f32
    %29 = vector.broadcast %cst_10 : f32 to vector<16x128xf32>
    %30 = arith.maximumf %28, %29 : vector<16x128xf32>
    %c0_11 = arith.constant 0 : index
    %c0_12 = arith.constant 0 : index
    %31 = vector.load %arg6[%c0_11, %c0_12] : memref<16x1xf32, #tpu.memory_space<vmem>>, vector<16x1xf32>
    %32 = vector.broadcast %31 : vector<16x1xf32> to vector<16x128xf32>
    %33 = arith.mulf %32, %30 : vector<16x128xf32>
    %cst_13 = arith.constant dense<0.000000e+00> : vector<128xf32>
    %34 = vector.multi_reduction <add>, %33, %cst_13 [0] : vector<16x128xf32> to vector<128xf32>
    %35 = vector.shape_cast %34 : vector<128xf32> to vector<1x128xf32>
    %c0_14 = arith.constant 0 : index
    %c0_15 = arith.constant 0 : index
    %36 = vector.load %arg7[%c0_14, %c0_15] : memref<1x1xf32, #tpu.memory_space<vmem>>, vector<1x1xf32>
    %37 = vector.broadcast %36 : vector<1x1xf32> to vector<1x128xf32>
    %38 = arith.addf %35, %37 : vector<1x128xf32>
    %c0_16 = arith.constant 0 : index
    %c0_17 = arith.constant 0 : index
    %39 = vector.load %arg8[%c0_16, %c0_17] : memref<1x128xf32, #tpu.memory_space<vmem>>, vector<1x128xf32>
    tpu.vector_store %arg8[%c0_16, %c0_17], %38 {strides = array<i32>} : memref<1x128xf32, #tpu.memory_space<vmem>>, vector<1x128xf32>,
    return
  }
  func.func @transform_0(%arg0: i32) -> (i32, i32) {
    %c0_i32 = arith.constant 0 : i32
    %c0_i32_0 = arith.constant 0 : i32
    return %c0_i32, %arg0 : i32, i32
  }
  func.func @transform_1(%arg0: i32) -> (i32, i32) {
    %c0_i32 = arith.constant 0 : i32
    %c0_i32_0 = arith.constant 0 : i32
    %c0_i32_1 = arith.constant 0 : i32
    return %c0_i32, %c0_i32_0 : i32, i32
  }
  func.func @transform_2(%arg0: i32) -> (i32, i32) {
    %c0_i32 = arith.constant 0 : i32
    %c0_i32_0 = arith.constant 0 : i32
    %c0_i32_1 = arith.constant 0 : i32
    return %c0_i32, %c0_i32_0 : i32, i32
  }
  func.func @transform_3(%arg0: i32) -> (i32, i32) {
    %c0_i32 = arith.constant 0 : i32
    %c0_i32_0 = arith.constant 0 : i32
    %c0_i32_1 = arith.constant 0 : i32
    return %c0_i32, %c0_i32_0 : i32, i32
  }
  func.func @transform_4(%arg0: i32) -> (i32, i32) {
    %c0_i32 = arith.constant 0 : i32
    %c0_i32_0 = arith.constant 0 : i32
    %c0_i32_1 = arith.constant 0 : i32
    return %c0_i32, %c0_i32_0 : i32, i32
  }
  func.func @transform_5(%arg0: i32) -> (i32, i32) {
    %c0_i32 = arith.constant 0 : i32
    %c0_i32_0 = arith.constant 0 : i32
    %c0_i32_1 = arith.constant 0 : i32
    return %c0_i32, %c0_i32_0 : i32, i32
  }
  func.func @transform_6(%arg0: i32) -> (i32, i32) {
    %c0_i32 = arith.constant 0 : i32
    %c0_i32_0 = arith.constant 0 : i32
    %c0_i32_1 = arith.constant 0 : i32
    return %c0_i32, %c0_i32_0 : i32, i32
  }
  func.func @transform_7(%arg0: i32) -> (i32, i32) {
    %c0_i32 = arith.constant 0 : i32
    %c0_i32_0 = arith.constant 0 : i32
    return %c0_i32, %arg0 : i32, i32
  }
}

</mosaic_0001>

<llo_original>
// kernel: critic_forward.1
$region0: #{critic_forward.1}
  #allocation0 [shape = 'u32[]', space=smem, size = 0x4, offset = 0x4, fixed_abs, tag = 'smem constant byte address 0x4 - core index']
  #allocation1 [shape = 'u32[144,128]{1,0:T(1,128)}', space=vmem, size = 0x12000, scoped, tag = 'internal scratch']
  #allocation2 [shape = 'f32[1,1]{1,0:T(1,128)S(1)}', space=vmem, size = 0x200, scoped, tag = 'scoped memory for critic_forward.1']
  %s0 = inlined_call_operand.vmem [shape: f32[3,128], index: 0, kind: input, shape index: {}]
  %s1 = inlined_call_operand.vmem [shape: f32[32,3], index: 1, kind: input, shape index: {}]
  %s2 = inlined_call_operand.vmem [shape: f32[32,1], index: 2, kind: input, shape index: {}]
  %s3 = inlined_call_operand.vmem [shape: f32[16,32], index: 3, kind: input, shape index: {}]
  %s4 = inlined_call_operand.vmem [shape: f32[16,1], index: 4, kind: input, shape index: {}]
  %s5 = inlined_call_operand.vmem [shape: f32[16,1], index: 5, kind: input, shape index: {}]
  %s6 = inlined_call_operand.<no memory space> [shape: f32[1,1], index: 6, kind: input, shape index: {}]
  %s7 = inlined_call_operand.vmem [shape: f32[1,128], index: 7, kind: output, shape index: {}]
  %s8 = sld [smem:[#allocation0]]
  $region38: #{critic_forward.1} parent=0
    _
  %s10 = ssub.s32 1, %s8
  %s11 = scalar_select 0, %s10, %s8
  %v12 = vstv %s6
  %13 = vst [vmem:[#allocation2] sm:$0x1] %v12
  // Predicated region
  $region2: #{critic_forward.1} parent=0 // pred_check
    _
  $region3: #{critic_forward.1} parent=0 // pred_check_branch
    %15 = sbr.rel (0) target = $region5
  $region4: #{critic_forward.1} parent=0 // pred_region
    _
  $region5: #{critic_forward.1} parent=0 // pred_fallthru
    _
  // Predicated region
  $region6: #{critic_forward.1} parent=0 // pred_check
    _
  $region7: #{critic_forward.1} parent=0 // pred_check_branch
    %17 = sbr.rel (0) target = $region9
  $region8: #{critic_forward.1} parent=0 // pred_region
    _
  $region9: #{critic_forward.1} parent=0 // pred_fallthru
    _
  // Predicated region
  $region10: #{critic_forward.1} parent=0 // pred_check
    _
  $region11: #{critic_forward.1} parent=0 // pred_check_branch
    %19 = sbr.rel (0) target = $region13
  $region12: #{critic_forward.1} parent=0 // pred_region
    _
  $region13: #{critic_forward.1} parent=0 // pred_fallthru
    _
  // Predicated region
  $region14: #{critic_forward.1} parent=0 // pred_check
    _
  $region15: #{critic_forward.1} parent=0 // pred_check_branch
    %21 = sbr.rel (0) target = $region17
  $region16: #{critic_forward.1} parent=0 // pred_region
    _
  $region17: #{critic_forward.1} parent=0 // pred_fallthru
    _
  // Predicated region
  $region18: #{critic_forward.1} parent=0 // pred_check
    _
  $region19: #{critic_forward.1} parent=0 // pred_check_branch
    %23 = sbr.rel (0) target = $region21
  $region20: #{critic_forward.1} parent=0 // pred_region
    _
  $region21: #{critic_forward.1} parent=0 // pred_fallthru
    _
  // Predicated region
  $region22: #{critic_forward.1} parent=0 // pred_check
    _
  $region23: #{critic_forward.1} parent=0 // pred_check_branch
    %25 = sbr.rel (0) target = $region25
  $region24: #{critic_forward.1} parent=0 // pred_region
    _
  $region25: #{critic_forward.1} parent=0 // pred_fallthru
    _
  // Predicated region
  $region26: #{critic_forward.1} parent=0 // pred_check
    _
  $region27: #{critic_forward.1} parent=0 // pred_check_branch
    %27 = sbr.rel (0) target = $region29
  $region28: #{critic_forward.1} parent=0 // pred_region
    _
  $region29: #{critic_forward.1} parent=0 // pred_fallthru
    _
  %v28 = vld [vmem:[%s0] sm:$0x7]
  %v29 = vld [vmem:[%s1] sm:$0xff]
  %v30 = vld [vmem:[%s1 + $0x8] sm:$0xff]
  %v31 = vld [vmem:[%s1 + $0x10] sm:$0xff]
  %v32 = vld [vmem:[%s1 + $0x18] sm:$0xff]
  %34 = vset.pattern.permute.xlu0 0
  %35 = vperm.xlu0 %34, %v29
  %v36 = vpop.permute.xlu0 %35
  %39 = vset.pattern.permute.xlu0 0
  %40 = vperm.xlu0 %39, %v30
  %v41 = vpop.permute.xlu0 %40
  %44 = vset.pattern.permute.xlu0 0
  %45 = vperm.xlu0 %44, %v31
  %v46 = vpop.permute.xlu0 %45
  %49 = vset.pattern.permute.xlu0 0
  %50 = vperm.xlu0 %49, %v32
  %v51 = vpop.permute.xlu0 %50
  %v53 = vlaneseq
  %v54 = vshrl.u32 %v53, 7
  %v55 = vsub.s32 0, %v54
  %v56 = vrot.slane %v28, %v55
  %v57 = vmul.f32 %v36, %v56
  %v58 = vmul.f32 %v41, %v56
  %v59 = vmul.f32 %v46, %v56
  %v60 = vmul.f32 %v51, %v56
  %61 = vset.pattern.permute.xlu0 1
  %62 = vperm.xlu0 %61, %v29
  %v63 = vpop.permute.xlu0 %62
  %65 = vset.pattern.permute.xlu0 1
  %66 = vperm.xlu0 %65, %v30
  %v67 = vpop.permute.xlu0 %66
  %69 = vset.pattern.permute.xlu0 1
  %70 = vperm.xlu0 %69, %v31
  %v71 = vpop.permute.xlu0 %70
  %73 = vset.pattern.permute.xlu0 1
  %74 = vperm.xlu0 %73, %v32
  %v75 = vpop.permute.xlu0 %74
  %v77 = vlaneseq
  %v78 = vshrl.u32 %v77, 7
  %v79 = vsub.s32 1, %v78
  %v80 = vrot.slane %v28, %v79
  %v81 = vmul.f32 %v63, %v80
  %v82 = vmul.f32 %v67, %v80
  %v83 = vmul.f32 %v71, %v80
  %v84 = vmul.f32 %v75, %v80
  %v85 = vadd.f32 %v57, %v81
  %v86 = vadd.f32 %v58, %v82
  %v87 = vadd.f32 %v59, %v83
  %v88 = vadd.f32 %v60, %v84
  %89 = vset.pattern.permute.xlu0 2
  %90 = vperm.xlu0 %89, %v29
  %v91 = vpop.permute.xlu0 %90
  %93 = vset.pattern.permute.xlu0 2
  %94 = vperm.xlu0 %93, %v30
  %v95 = vpop.permute.xlu0 %94
  %97 = vset.pattern.permute.xlu0 2
  %98 = vperm.xlu0 %97, %v31
  %v99 = vpop.permute.xlu0 %98
  %101 = vset.pattern.permute.xlu0 2
  %102 = vperm.xlu0 %101, %v32
  %v103 = vpop.permute.xlu0 %102
  %v105 = vlaneseq
  %v106 = vshrl.u32 %v105, 7
  %v107 = vsub.s32 2, %v106
  %v108 = vrot.slane %v28, %v107
  %v109 = vmul.f32 %v91, %v108
  %v110 = vmul.f32 %v95, %v108
  %v111 = vmul.f32 %v99, %v108
  %v112 = vmul.f32 %v103, %v108
  %v113 = vadd.f32 %v85, %v109
  %v114 = vadd.f32 %v86, %v110
  %v115 = vadd.f32 %v87, %v111
  %v116 = vadd.f32 %v88, %v112
  %v117 = vld [vmem:[%s2] sm:$0xff]
  %v118 = vld [vmem:[%s2 + $0x8] sm:$0xff]
  %v119 = vld [vmem:[%s2 + $0x10] sm:$0xff]
  %v120 = vld [vmem:[%s2 + $0x18] sm:$0xff]
  %122 = vset.pattern.permute.xlu0 0
  %123 = vperm.xlu0 %122, %v117
  %v124 = vpop.permute.xlu0 %123
  %127 = vset.pattern.permute.xlu0 0
  %128 = vperm.xlu0 %127, %v118
  %v129 = vpop.permute.xlu0 %128
  %132 = vset.pattern.permute.xlu0 0
  %133 = vperm.xlu0 %132, %v119
  %v134 = vpop.permute.xlu0 %133
  %137 = vset.pattern.permute.xlu0 0
  %138 = vperm.xlu0 %137, %v120
  %v139 = vpop.permute.xlu0 %138
  %v141 = vadd.f32 %v113, %v124
  %v142 = vadd.f32 %v114, %v129
  %v143 = vadd.f32 %v115, %v134
  %v144 = vadd.f32 %v116, %v139
  %v145 = vmax.f32 %v141, 0.0
  %v146 = vmax.f32 %v142, 0.0
  %v147 = vmax.f32 %v143, 0.0
  %v148 = vmax.f32 %v144, 0.0
  %v149 = vld [vmem:[%s3] sm:$0xff]
  %v150 = vld [vmem:[%s3 + $0x8] sm:$0xff]
  %v151 = vld [vmem:[%s4] sm:$0xff]
  %v152 = vld [vmem:[%s4 + $0x8] sm:$0xff]
  %154 = vset.pattern.permute.xlu0 0
  %155 = vperm.xlu0 %154, %v151
  %v156 = vpop.permute.xlu0 %155
  %159 = vset.pattern.permute.xlu0 0
  %160 = vperm.xlu0 %159, %v152
  %v161 = vpop.permute.xlu0 %160
  %vm163 = vcmask 261120
  %v165 = vsel %vm163, %v149, 0
  %v168 = vsel %vm163, %v150, 0
  %170 = vmatprep.subr.mxu0 0.0
  %171 = vmatpush1.msra.mxu0 0.0
  %172 = vmatprep.subr.mxu0 0.0
  %173 = vmatpush1.msra.mxu0 0.0
  %174 = vmatprep.subr.mxu0 0.0
  %175 = vmatpush1.msra.mxu0 0.0
  %176 = vmatprep.subr.mxu0 0.0
  %177 = vmatpush1.msra.mxu0 0.0
  %178 = vmatprep.subr.mxu0 0.0
  %179 = vmatpush1.msra.mxu0 0.0
  %180 = vmatprep.subr.mxu0 0.0
  %181 = vmatpush1.msra.mxu0 0.0
  %182 = vmatprep.subr.mxu0 0.0
  %183 = vmatpush1.msra.mxu0 0.0
  %184 = vmatprep.subr.mxu0 0.0
  %185 = vmatpush1.msra.mxu0 0.0
  %186 = vmatprep.subr.mxu0 0.0
  %187 = vmatpush1.msra.mxu0 0.0
  %188 = vmatprep.subr.mxu0 0.0
  %189 = vmatpush1.msra.mxu0 0.0
  %190 = vmatprep.subr.mxu0 0.0
  %191 = vmatpush1.msra.mxu0 0.0
  %192 = vmatprep.subr.mxu0 0.0
  %193 = vmatpush1.msra.mxu0 0.0
  %194 = vmatprep.subr.mxu0 0.0
  %v195 = vand.u32 %v148, 4294901760
  %196 = vmatpush1.msra.mxu0 %v195
  %197 = vmatprep.subr.mxu0 0.0
  %v198 = vand.u32 %v147, 4294901760
  %199 = vmatpush1.msra.mxu0 %v198
  %200 = vmatprep.subr.mxu0 0.0
  %v201 = vand.u32 %v146, 4294901760
  %202 = vmatpush1.msra.mxu0 %v201
  %203 = vmatprep.subr.mxu0 0.0
  %v204 = vand.u32 %v145, 4294901760
  %205 = vmatpush1.msra.mxu0 %v204
  %206 = vmatprep.subr.mxu0 0.0
  %207 = vmatpush2.msra.mxu0 0.0
  %208 = vmatprep.subr.mxu0 0.0
  %209 = vmatpush2.msra.mxu0 0.0
  %210 = vmatprep.subr.mxu0 0.0
  %211 = vmatpush2.msra.mxu0 0.0
  %212 = vmatprep.subr.mxu0 0.0
  %213 = vmatpush2.msra.mxu0 0.0
  %214 = vmatprep.subr.mxu0 0.0
  %215 = vmatpush2.msra.mxu0 0.0
  %216 = vmatprep.subr.mxu0 0.0
  %217 = vmatpush2.msra.mxu0 0.0
  %218 = vmatprep.subr.mxu0 0.0
  %219 = vmatpush2.msra.mxu0 0.0
  %220 = vmatprep.subr.mxu0 0.0
  %221 = vmatpush2.msra.mxu0 0.0
  %222 = vmatprep.subr.mxu0 0.0
  %223 = vmatpush2.msra.mxu0 0.0
  %224 = vmatprep.subr.mxu0 0.0
  %225 = vmatpush2.msra.mxu0 0.0
  %226 = vmatprep.subr.mxu0 0.0
  %227 = vmatpush2.msra.mxu0 0.0
  %228 = vmatprep.subr.mxu0 0.0
  %229 = vmatpush2.msra.mxu0 0.0
  %230 = vmatprep.subr.mxu0 0.0
  %231 = vmatpush2.msra.mxu0 0.0
  %232 = vmatprep.subr.mxu0 0.0
  %233 = vmatpush2.msra.mxu0 0.0
  %234 = vmatprep.subr.mxu0 0.0
  %235 = vmatpush2.msra.mxu0 0.0
  %236 = vmatprep.subr.mxu0 0.0
  %237 = vmatpush2.msra.mxu0 0.0
  %238 = vmatprep.mubr.f32.mxu0 0.0
  %v239 = vand.u32 %v165, 4294901760
  %v240 = vsub.f32 %v165, %v239
  %v241 = vand.u32 %v240, 4294901760
  %v242 = vsub.f32 %v240, %v241
  %v243 = vand.u32 %v242, 4294901760
  %244 = vmatmul.mubr.f32.gmra.mxu0 %v243
  %v245 = vpop.f32.mrf.mxu0
  %v246 = vadd.f32 %v156, %v245
  %v247 = vpop.f32.mrf.mxu0
  %248 = vmatprep.mubr.f32.mxu0 0.0
  %v249 = vand.u32 %v168, 4294901760
  %v250 = vsub.f32 %v168, %v249
  %v251 = vand.u32 %v250, 4294901760
  %v252 = vsub.f32 %v250, %v251
  %v253 = vand.u32 %v252, 4294901760
  %254 = vmatmul.mubr.f32.gmra.mxu0 %v253
  %v255 = vpop.f32.mrf.mxu0
  %v256 = vadd.f32 %v161, %v255
  %v257 = vpop.f32.mrf.mxu0
  %258 = vdwg.mxu0
  %259 = vmatprep.subr.mxu0 0.0
  %260 = vmatpush1.msra.mxu0 0.0
  %261 = vmatprep.subr.mxu0 0.0
  %262 = vmatpush1.msra.mxu0 0.0
  %263 = vmatprep.subr.mxu0 0.0
  %264 = vmatpush1.msra.mxu0 0.0
  %265 = vmatprep.subr.mxu0 0.0
  %266 = vmatpush1.msra.mxu0 0.0
  %267 = vmatprep.subr.mxu0 0.0
  %268 = vmatpush1.msra.mxu0 0.0
  %269 = vmatprep.subr.mxu0 0.0
  %270 = vmatpush1.msra.mxu0 0.0
  %271 = vmatprep.subr.mxu0 0.0
  %272 = vmatpush1.msra.mxu0 0.0
  %273 = vmatprep.subr.mxu0 0.0
  %274 = vmatpush1.msra.mxu0 0.0
  %275 = vmatprep.subr.mxu0 0.0
  %276 = vmatpush1.msra.mxu0 0.0
  %277 = vmatprep.subr.mxu0 0.0
  %278 = vmatpush1.msra.mxu0 0.0
  %279 = vmatprep.subr.mxu0 0.0
  %280 = vmatpush1.msra.mxu0 0.0
  %281 = vmatprep.subr.mxu0 0.0
  %282 = vmatpush1.msra.mxu0 0.0
  %283 = vmatprep.subr.mxu0 0.0
  %v284 = vand.u32 %v148, 4294901760
  %v285 = vsub.f32 %v148, %v284
  %v286 = vand.u32 %v285, 4294901760
  %v287 = vsub.f32 %v285, %v286
  %v288 = vand.u32 %v287, 4294901760
  %289 = vmatpush1.msra.mxu0 %v288
  %290 = vmatprep.subr.mxu0 0.0
  %v291 = vand.u32 %v147, 4294901760
  %v292 = vsub.f32 %v147, %v291
  %v293 = vand.u32 %v292, 4294901760
  %v294 = vsub.f32 %v292, %v293
  %v295 = vand.u32 %v294, 4294901760
  %296 = vmatpush1.msra.mxu0 %v295
  %297 = vmatprep.subr.mxu0 0.0
  %v298 = vand.u32 %v146, 4294901760
  %v299 = vsub.f32 %v146, %v298
  %v300 = vand.u32 %v299, 4294901760
  %v301 = vsub.f32 %v299, %v300
  %v302 = vand.u32 %v301, 4294901760
  %303 = vmatpush1.msra.mxu0 %v302
  %304 = vmatprep.subr.mxu0 0.0
  %v305 = vand.u32 %v145, 4294901760
  %v306 = vsub.f32 %v145, %v305
  %v307 = vand.u32 %v306, 4294901760
  %v308 = vsub.f32 %v306, %v307
  %v309 = vand.u32 %v308, 4294901760
  %310 = vmatpush1.msra.mxu0 %v309
  %311 = vmatprep.subr.mxu0 0.0
  %312 = vmatpush2.msra.mxu0 0.0
  %313 = vmatprep.subr.mxu0 0.0
  %314 = vmatpush2.msra.mxu0 0.0
  %315 = vmatprep.subr.mxu0 0.0
  %316 = vmatpush2.msra.mxu0 0.0
  %317 = vmatprep.subr.mxu0 0.0
  %318 = vmatpush2.msra.mxu0 0.0
  %319 = vmatprep.subr.mxu0 0.0
  %320 = vmatpush2.msra.mxu0 0.0
  %321 = vmatprep.subr.mxu0 0.0
  %322 = vmatpush2.msra.mxu0 0.0
  %323 = vmatprep.subr.mxu0 0.0
  %324 = vmatpush2.msra.mxu0 0.0
  %325 = vmatprep.subr.mxu0 0.0
  %326 = vmatpush2.msra.mxu0 0.0
  %327 = vmatprep.subr.mxu0 0.0
  %328 = vmatpush2.msra.mxu0 0.0
  %329 = vmatprep.subr.mxu0 0.0
  %330 = vmatpush2.msra.mxu0 0.0
  %331 = vmatprep.subr.mxu0 0.0
  %332 = vmatpush2.msra.mxu0 0.0
  %333 = vmatprep.subr.mxu0 0.0
  %334 = vmatpush2.msra.mxu0 0.0
  %335 = vmatprep.subr.mxu0 0.0
  %336 = vmatpush2.msra.mxu0 0.0
  %337 = vmatprep.subr.mxu0 0.0
  %338 = vmatpush2.msra.mxu0 0.0
  %339 = vmatprep.subr.mxu0 0.0
  %340 = vmatpush2.msra.mxu0 0.0
  %341 = vmatprep.subr.mxu0 0.0
  %342 = vmatpush2.msra.mxu0 0.0
  %343 = vmatprep.mubr.f32.mxu0 0.0
  %v344 = vand.u32 %v165, 4294901760
  %345 = vmatmul.mubr.f32.gmra.mxu0 %v344
  %v346 = vpop.f32.mrf.mxu0
  %v347 = vadd.f32 %v246, %v346
  %v348 = vpop.f32.mrf.mxu0
  %349 = vmatprep.mubr.f32.mxu0 0.0
  %v350 = vand.u32 %v168, 4294901760
  %351 = vmatmul.mubr.f32.gmra.mxu0 %v350
  %v352 = vpop.f32.mrf.mxu0
  %v353 = vadd.f32 %v256, %v352
  %v354 = vpop.f32.mrf.mxu0
  %355 = vdwg.mxu0
  %356 = vmatprep.subr.mxu0 0.0
  %357 = vmatpush1.msra.mxu0 0.0
  %358 = vmatprep.subr.mxu0 0.0
  %359 = vmatpush1.msra.mxu0 0.0
  %360 = vmatprep.subr.mxu0 0.0
  %361 = vmatpush1.msra.mxu0 0.0
  %362 = vmatprep.subr.mxu0 0.0
  %363 = vmatpush1.msra.mxu0 0.0
  %364 = vmatprep.subr.mxu0 0.0
  %365 = vmatpush1.msra.mxu0 0.0
  %366 = vmatprep.subr.mxu0 0.0
  %367 = vmatpush1.msra.mxu0 0.0
  %368 = vmatprep.subr.mxu0 0.0
  %369 = vmatpush1.msra.mxu0 0.0
  %370 = vmatprep.subr.mxu0 0.0
  %371 = vmatpush1.msra.mxu0 0.0
  %372 = vmatprep.subr.mxu0 0.0
  %373 = vmatpush1.msra.mxu0 0.0
  %374 = vmatprep.subr.mxu0 0.0
  %375 = vmatpush1.msra.mxu0 0.0
  %376 = vmatprep.subr.mxu0 0.0
  %377 = vmatpush1.msra.mxu0 0.0
  %378 = vmatprep.subr.mxu0 0.0
  %379 = vmatpush1.msra.mxu0 0.0
  %380 = vmatprep.subr.mxu0 0.0
  %v381 = vand.u32 %v148, 4294901760
  %v382 = vsub.f32 %v148, %v381
  %383 = vmatpush1.msra.mxu0 %v382
  %384 = vmatprep.subr.mxu0 0.0
  %v385 = vand.u32 %v147, 4294901760
  %v386 = vsub.f32 %v147, %v385
  %387 = vmatpush1.msra.mxu0 %v386
  %388 = vmatprep.subr.mxu0 0.0
  %v389 = vand.u32 %v146, 4294901760
  %v390 = vsub.f32 %v146, %v389
  %391 = vmatpush1.msra.mxu0 %v390
  %392 = vmatprep.subr.mxu0 0.0
  %v393 = vand.u32 %v145, 4294901760
  %v394 = vsub.f32 %v145, %v393
  %395 = vmatpush1.msra.mxu0 %v394
  %396 = vmatprep.subr.mxu0 0.0
  %397 = vmatpush2.msra.mxu0 0.0
  %398 = vmatprep.subr.mxu0 0.0
  %399 = vmatpush2.msra.mxu0 0.0
  %400 = vmatprep.subr.mxu0 0.0
  %401 = vmatpush2.msra.mxu0 0.0
  %402 = vmatprep.subr.mxu0 0.0
  %403 = vmatpush2.msra.mxu0 0.0
  %404 = vmatprep.subr.mxu0 0.0
  %405 = vmatpush2.msra.mxu0 0.0
  %406 = vmatprep.subr.mxu0 0.0
  %407 = vmatpush2.msra.mxu0 0.0
  %408 = vmatprep.subr.mxu0 0.0
  %409 = vmatpush2.msra.mxu0 0.0
  %410 = vmatprep.subr.mxu0 0.0
  %411 = vmatpush2.msra.mxu0 0.0
  %412 = vmatprep.subr.mxu0 0.0
  %413 = vmatpush2.msra.mxu0 0.0
  %414 = vmatprep.subr.mxu0 0.0
  %415 = vmatpush2.msra.mxu0 0.0
  %416 = vmatprep.subr.mxu0 0.0
  %417 = vmatpush2.msra.mxu0 0.0
  %418 = vmatprep.subr.mxu0 0.0
  %419 = vmatpush2.msra.mxu0 0.0
  %420 = vmatprep.subr.mxu0 0.0
  %421 = vmatpush2.msra.mxu0 0.0
  %422 = vmatprep.subr.mxu0 0.0
  %423 = vmatpush2.msra.mxu0 0.0
  %424 = vmatprep.subr.mxu0 0.0
  %425 = vmatpush2.msra.mxu0 0.0
  %426 = vmatprep.subr.mxu0 0.0
  %427 = vmatpush2.msra.mxu0 0.0
  %428 = vmatprep.mubr.f32.mxu0 0.0
  %v429 = vand.u32 %v165, 4294901760
  %v430 = vsub.f32 %v165, %v429
  %431 = vmatmul.mubr.f32.gmra.mxu0 %v430
  %v432 = vpop.f32.mrf.mxu0
  %v433 = vadd.f32 %v347, %v432
  %v434 = vpop.f32.mrf.mxu0
  %435 = vmatprep.mubr.f32.mxu0 0.0
  %v436 = vand.u32 %v168, 4294901760
  %v437 = vsub.f32 %v168, %v436
  %438 = vmatmul.mubr.f32.gmra.mxu0 %v437
  %v439 = vpop.f32.mrf.mxu0
  %v440 = vadd.f32 %v353, %v439
  %v441 = vpop.f32.mrf.mxu0
  %442 = vdwg.mxu0
  %443 = vmatprep.subr.mxu0 0.0
  %444 = vmatpush1.msra.mxu0 0.0
  %445 = vmatprep.subr.mxu0 0.0
  %446 = vmatpush1.msra.mxu0 0.0
  %447 = vmatprep.subr.mxu0 0.0
  %448 = vmatpush1.msra.mxu0 0.0
  %449 = vmatprep.subr.mxu0 0.0
  %450 = vmatpush1.msra.mxu0 0.0
  %451 = vmatprep.subr.mxu0 0.0
  %452 = vmatpush1.msra.mxu0 0.0
  %453 = vmatprep.subr.mxu0 0.0
  %454 = vmatpush1.msra.mxu0 0.0
  %455 = vmatprep.subr.mxu0 0.0
  %456 = vmatpush1.msra.mxu0 0.0
  %457 = vmatprep.subr.mxu0 0.0
  %458 = vmatpush1.msra.mxu0 0.0
  %459 = vmatprep.subr.mxu0 0.0
  %460 = vmatpush1.msra.mxu0 0.0
  %461 = vmatprep.subr.mxu0 0.0
  %462 = vmatpush1.msra.mxu0 0.0
  %463 = vmatprep.subr.mxu0 0.0
  %464 = vmatpush1.msra.mxu0 0.0
  %465 = vmatprep.subr.mxu0 0.0
  %466 = vmatpush1.msra.mxu0 0.0
  %467 = vmatprep.subr.mxu0 0.0
  %v468 = vand.u32 %v148, 4294901760
  %469 = vmatpush1.msra.mxu0 %v468
  %470 = vmatprep.subr.mxu0 0.0
  %v471 = vand.u32 %v147, 4294901760
  %472 = vmatpush1.msra.mxu0 %v471
  %473 = vmatprep.subr.mxu0 0.0
  %v474 = vand.u32 %v146, 4294901760
  %475 = vmatpush1.msra.mxu0 %v474
  %476 = vmatprep.subr.mxu0 0.0
  %v477 = vand.u32 %v145, 4294901760
  %478 = vmatpush1.msra.mxu0 %v477
  %479 = vmatprep.subr.mxu0 0.0
  %480 = vmatpush2.msra.mxu0 0.0
  %481 = vmatprep.subr.mxu0 0.0
  %482 = vmatpush2.msra.mxu0 0.0
  %483 = vmatprep.subr.mxu0 0.0
  %484 = vmatpush2.msra.mxu0 0.0
  %485 = vmatprep.subr.mxu0 0.0
  %486 = vmatpush2.msra.mxu0 0.0
  %487 = vmatprep.subr.mxu0 0.0
  %488 = vmatpush2.msra.mxu0 0.0
  %489 = vmatprep.subr.mxu0 0.0
  %490 = vmatpush2.msra.mxu0 0.0
  %491 = vmatprep.subr.mxu0 0.0
  %492 = vmatpush2.msra.mxu0 0.0
  %493 = vmatprep.subr.mxu0 0.0
  %494 = vmatpush2.msra.mxu0 0.0
  %495 = vmatprep.subr.mxu0 0.0
  %496 = vmatpush2.msra.mxu0 0.0
  %497 = vmatprep.subr.mxu0 0.0
  %498 = vmatpush2.msra.mxu0 0.0
  %499 = vmatprep.subr.mxu0 0.0
  %500 = vmatpush2.msra.mxu0 0.0
  %501 = vmatprep.subr.mxu0 0.0
  %502 = vmatpush2.msra.mxu0 0.0
  %503 = vmatprep.subr.mxu0 0.0
  %504 = vmatpush2.msra.mxu0 0.0
  %505 = vmatprep.subr.mxu0 0.0
  %506 = vmatpush2.msra.mxu0 0.0
  %507 = vmatprep.subr.mxu0 0.0
  %508 = vmatpush2.msra.mxu0 0.0
  %509 = vmatprep.subr.mxu0 0.0
  %510 = vmatpush2.msra.mxu0 0.0
  %511 = vmatprep.mubr.f32.mxu0 0.0
  %v512 = vand.u32 %v165, 4294901760
  %v513 = vsub.f32 %v165, %v512
  %v514 = vand.u32 %v513, 4294901760
  %515 = vmatmul.mubr.f32.gmra.mxu0 %v514
  %v516 = vpop.f32.mrf.mxu0
  %v517 = vadd.f32 %v433, %v516
  %v518 = vpop.f32.mrf.mxu0
  %519 = vmatprep.mubr.f32.mxu0 0.0
  %v520 = vand.u32 %v168, 4294901760
  %v521 = vsub.f32 %v168, %v520
  %v522 = vand.u32 %v521, 4294901760
  %523 = vmatmul.mubr.f32.gmra.mxu0 %v522
  %v524 = vpop.f32.mrf.mxu0
  %v525 = vadd.f32 %v440, %v524
  %v526 = vpop.f32.mrf.mxu0
  %527 = vdwg.mxu0
  %528 = vmatprep.subr.mxu0 0.0
  %529 = vmatpush1.msra.mxu0 0.0
  %530 = vmatprep.subr.mxu0 0.0
  %531 = vmatpush1.msra.mxu0 0.0
  %532 = vmatprep.subr.mxu0 0.0
  %533 = vmatpush1.msra.mxu0 0.0
  %534 = vmatprep.subr.mxu0 0.0
  %535 = vmatpush1.msra.mxu0 0.0
  %536 = vmatprep.subr.mxu0 0.0
  %537 = vmatpush1.msra.mxu0 0.0
  %538 = vmatprep.subr.mxu0 0.0
  %539 = vmatpush1.msra.mxu0 0.0
  %540 = vmatprep.subr.mxu0 0.0
  %541 = vmatpush1.msra.mxu0 0.0
  %542 = vmatprep.subr.mxu0 0.0
  %543 = vmatpush1.msra.mxu0 0.0
  %544 = vmatprep.subr.mxu0 0.0
  %545 = vmatpush1.msra.mxu0 0.0
  %546 = vmatprep.subr.mxu0 0.0
  %547 = vmatpush1.msra.mxu0 0.0
  %548 = vmatprep.subr.mxu0 0.0
  %549 = vmatpush1.msra.mxu0 0.0
  %550 = vmatprep.subr.mxu0 0.0
  %551 = vmatpush1.msra.mxu0 0.0
  %552 = vmatprep.subr.mxu0 0.0
  %v553 = vand.u32 %v148, 4294901760
  %v554 = vsub.f32 %v148, %v553
  %v555 = vand.u32 %v554, 4294901760
  %556 = vmatpush1.msra.mxu0 %v555
  %557 = vmatprep.subr.mxu0 0.0
  %v558 = vand.u32 %v147, 4294901760
  %v559 = vsub.f32 %v147, %v558
  %v560 = vand.u32 %v559, 4294901760
  %561 = vmatpush1.msra.mxu0 %v560
  %562 = vmatprep.subr.mxu0 0.0
  %v563 = vand.u32 %v146, 4294901760
  %v564 = vsub.f32 %v146, %v563
  %v565 = vand.u32 %v564, 4294901760
  %566 = vmatpush1.msra.mxu0 %v565
  %567 = vmatprep.subr.mxu0 0.0
  %v568 = vand.u32 %v145, 4294901760
  %v569 = vsub.f32 %v145, %v568
  %v570 = vand.u32 %v569, 4294901760
  %571 = vmatpush1.msra.mxu0 %v570
  %572 = vmatprep.subr.mxu0 0.0
  %573 = vmatpush2.msra.mxu0 0.0
  %574 = vmatprep.subr.mxu0 0.0
  %575 = vmatpush2.msra.mxu0 0.0
  %576 = vmatprep.subr.mxu0 0.0
  %577 = vmatpush2.msra.mxu0 0.0
  %578 = vmatprep.subr.mxu0 0.0
  %579 = vmatpush2.msra.mxu0 0.0
  %580 = vmatprep.subr.mxu0 0.0
  %581 = vmatpush2.msra.mxu0 0.0
  %582 = vmatprep.subr.mxu0 0.0
  %583 = vmatpush2.msra.mxu0 0.0
  %584 = vmatprep.subr.mxu0 0.0
  %585 = vmatpush2.msra.mxu0 0.0
  %586 = vmatprep.subr.mxu0 0.0
  %587 = vmatpush2.msra.mxu0 0.0
  %588 = vmatprep.subr.mxu0 0.0
  %589 = vmatpush2.msra.mxu0 0.0
  %590 = vmatprep.subr.mxu0 0.0
  %591 = vmatpush2.msra.mxu0 0.0
  %592 = vmatprep.subr.mxu0 0.0
  %593 = vmatpush2.msra.mxu0 0.0
  %594 = vmatprep.subr.mxu0 0.0
  %595 = vmatpush2.msra.mxu0 0.0
  %596 = vmatprep.subr.mxu0 0.0
  %597 = vmatpush2.msra.mxu0 0.0
  %598 = vmatprep.subr.mxu0 0.0
  %599 = vmatpush2.msra.mxu0 0.0
  %600 = vmatprep.subr.mxu0 0.0
  %601 = vmatpush2.msra.mxu0 0.0
  %602 = vmatprep.subr.mxu0 0.0
  %603 = vmatpush2.msra.mxu0 0.0
  %604 = vmatprep.mubr.f32.mxu0 0.0
  %v605 = vand.u32 %v165, 4294901760
  %606 = vmatmul.mubr.f32.gmra.mxu0 %v605
  %v607 = vpop.f32.mrf.mxu0
  %v608 = vadd.f32 %v517, %v607
  %v609 = vpop.f32.mrf.mxu0
  %610 = vmatprep.mubr.f32.mxu0 0.0
  %v611 = vand.u32 %v168, 4294901760
  %612 = vmatmul.mubr.f32.gmra.mxu0 %v611
  %v613 = vpop.f32.mrf.mxu0
  %v614 = vadd.f32 %v525, %v613
  %v615 = vpop.f32.mrf.mxu0
  %616 = vdwg.mxu0
  %617 = vmatprep.subr.mxu0 0.0
  %618 = vmatpush1.msra.mxu0 0.0
  %619 = vmatprep.subr.mxu0 0.0
  %620 = vmatpush1.msra.mxu0 0.0
  %621 = vmatprep.subr.mxu0 0.0
  %622 = vmatpush1.msra.mxu0 0.0
  %623 = vmatprep.subr.mxu0 0.0
  %624 = vmatpush1.msra.mxu0 0.0
  %625 = vmatprep.subr.mxu0 0.0
  %626 = vmatpush1.msra.mxu0 0.0
  %627 = vmatprep.subr.mxu0 0.0
  %628 = vmatpush1.msra.mxu0 0.0
  %629 = vmatprep.subr.mxu0 0.0
  %630 = vmatpush1.msra.mxu0 0.0
  %631 = vmatprep.subr.mxu0 0.0
  %632 = vmatpush1.msra.mxu0 0.0
  %633 = vmatprep.subr.mxu0 0.0
  %634 = vmatpush1.msra.mxu0 0.0
  %635 = vmatprep.subr.mxu0 0.0
  %636 = vmatpush1.msra.mxu0 0.0
  %637 = vmatprep.subr.mxu0 0.0
  %638 = vmatpush1.msra.mxu0 0.0
  %639 = vmatprep.subr.mxu0 0.0
  %640 = vmatpush1.msra.mxu0 0.0
  %641 = vmatprep.subr.mxu0 0.0
  %v642 = vand.u32 %v148, 4294901760
  %643 = vmatpush1.msra.mxu0 %v642
  %644 = vmatprep.subr.mxu0 0.0
  %v645 = vand.u32 %v147, 4294901760
  %646 = vmatpush1.msra.mxu0 %v645
  %647 = vmatprep.subr.mxu0 0.0
  %v648 = vand.u32 %v146, 4294901760
  %649 = vmatpush1.msra.mxu0 %v648
  %650 = vmatprep.subr.mxu0 0.0
  %v651 = vand.u32 %v145, 4294901760
  %652 = vmatpush1.msra.mxu0 %v651
  %653 = vmatprep.subr.mxu0 0.0
  %654 = vmatpush2.msra.mxu0 0.0
  %655 = vmatprep.subr.mxu0 0.0
  %656 = vmatpush2.msra.mxu0 0.0
  %657 = vmatprep.subr.mxu0 0.0
  %658 = vmatpush2.msra.mxu0 0.0
  %659 = vmatprep.subr.mxu0 0.0
  %660 = vmatpush2.msra.mxu0 0.0
  %661 = vmatprep.subr.mxu0 0.0
  %662 = vmatpush2.msra.mxu0 0.0
  %663 = vmatprep.subr.mxu0 0.0
  %664 = vmatpush2.msra.mxu0 0.0
  %665 = vmatprep.subr.mxu0 0.0
  %666 = vmatpush2.msra.mxu0 0.0
  %667 = vmatprep.subr.mxu0 0.0
  %668 = vmatpush2.msra.mxu0 0.0
  %669 = vmatprep.subr.mxu0 0.0
  %670 = vmatpush2.msra.mxu0 0.0
  %671 = vmatprep.subr.mxu0 0.0
  %672 = vmatpush2.msra.mxu0 0.0
  %673 = vmatprep.subr.mxu0 0.0
  %674 = vmatpush2.msra.mxu0 0.0
  %675 = vmatprep.subr.mxu0 0.0
  %676 = vmatpush2.msra.mxu0 0.0
  %677 = vmatprep.subr.mxu0 0.0
  %678 = vmatpush2.msra.mxu0 0.0
  %679 = vmatprep.subr.mxu0 0.0
  %680 = vmatpush2.msra.mxu0 0.0
  %681 = vmatprep.subr.mxu0 0.0
  %682 = vmatpush2.msra.mxu0 0.0
  %683 = vmatprep.subr.mxu0 0.0
  %684 = vmatpush2.msra.mxu0 0.0
  %685 = vmatprep.mubr.f32.mxu0 0.0
  %v686 = vand.u32 %v165, 4294901760
  %687 = vmatmul.mubr.f32.gmra.mxu0 %v686
  %v688 = vpop.f32.mrf.mxu0
  %v689 = vadd.f32 %v608, %v688
  %v690 = vpop.f32.mrf.mxu0
  %691 = vmatprep.mubr.f32.mxu0 0.0
  %v692 = vand.u32 %v168, 4294901760
  %693 = vmatmul.mubr.f32.gmra.mxu0 %v692
  %v694 = vpop.f32.mrf.mxu0
  %v695 = vadd.f32 %v614, %v694
  %v696 = vpop.f32.mrf.mxu0
  %697 = vdwg.mxu0
  %v698 = vmax.f32 %v689, 0.0
  %v699 = vmax.f32 %v695, 0.0
  %v700 = vld [vmem:[%s5] sm:$0xff]
  %v701 = vld [vmem:[%s5 + $0x8] sm:$0xff]
  %703 = vset.pattern.permute.xlu0 0
  %704 = vperm.xlu0 %703, %v700
  %v705 = vpop.permute.xlu0 %704
  %708 = vset.pattern.permute.xlu0 0
  %709 = vperm.xlu0 %708, %v701
  %v710 = vpop.permute.xlu0 %709
  %v712 = vmul.f32 %v705, %v698
  %v713 = vmul.f32 %v710, %v699
  %v714 = vadd.f32 %v712, %v713
  %v715 = vrot.slane %v714, 4
  %v716 = vadd.f32 %v714, %v715
  %v717 = vrot.slane %v716, 2
  %v718 = vadd.f32 %v716, %v717
  %v719 = vrot.slane %v718, 1
  %v720 = vadd.f32 %v718, %v719
  %v721 = vld [vmem:[#allocation2] sm:$0x1]
  %723 = vset.pattern.permute.xlu0 0
  %724 = vperm.xlu0 %723, %v721
  %v725 = vpop.permute.xlu0 %724
  %v727 = vlaneseq
  %v728 = vshrl.u32 %v727, 7
  %v729 = vsub.s32 0, %v728
  %v730 = vrot.slane %v725, %v729
  %v731 = vadd.f32 %v720, %v730
  %732 = vst [vmem:[%s7] sm:$0x1] %v731
  // Predicated region
  $region30: #{critic_forward.1} parent=0 // pred_check
    _
  $region31: #{critic_forward.1} parent=0 // pred_check_branch
    %734 = sbr.rel (0) target = $region33
  $region32: #{critic_forward.1} parent=0 // pred_region
    _
  $region33: #{critic_forward.1} parent=0 // pred_fallthru
    _
  // Predicated region
  $region34: #{critic_forward.1} parent=0 // pred_check
    _
  $region35: #{critic_forward.1} parent=0 // pred_check_branch
    %736 = sbr.rel (0) target = $region37
  $region36: #{critic_forward.1} parent=0 // pred_region
    _
  $region37: #{critic_forward.1} parent=0 // pred_fallthru
    _

</llo_original>
